<compile_context>
chip_gen: v7x
topology: tpu7x:2x2x1
jax: 0.10.0
libtpu: 0.0.40
codegen_flags: <defaults>
</compile_context>

<pallas_src>
import functools

import jax
import jax.numpy as jnp
from jax.experimental import pallas as pl
from jax.experimental.pallas import tpu as pltpu

_EPS2 = 1e-24  # (torch F.normalize eps = 1e-12) ** 2


def _round_up(x: int, m: int) -> int:
    return ((x + m - 1) // m) * m


def _cdiv(a: int, b: int) -> int:
    return (a + b - 1) // b


def _sublane_gran(dtype) -> int:
    # f32 -> 8, bf16 -> 16, int8/fp8 -> 32 (sublane packing granularity).
    return max(8, 32 // jnp.dtype(dtype).itemsize)


def _default_vmem_budgets() -> tuple[int, int]:
    """(pipelined-input budget, scoped vmem limit), generation aware."""
    cap = None
    try:
        cap = getattr(pltpu.get_tpu_info(), "vmem_capacity_bytes", None)
    except Exception:
        cap = None
    if cap is not None and cap >= 100 * 2**20:
        # v5e / v6e class chips: 128 MiB VMEM -> large tiles, generous limit.
        return 40 * 2**20, 96 * 2**20
    # v7x class (64 MiB VMEM) or unknown: stay conservative.
    return 12 * 2**20, 40 * 2**20


def _pick_tile(tile, n_rows, gran, budget_bytes, bytes_per_row, min_blocks):
    if tile is None:
        t = max(gran, (budget_bytes // max(bytes_per_row, 1)) // gran * gran)
        if min_blocks > 1:
            # Keep >= min_blocks grid steps so ("parallel",) can shard across
            # both TensorCores on v7x; harmless on single-TC v5e/v6e.
            t = min(t, _round_up(_cdiv(n_rows, min_blocks), gran))
    else:
        t = _round_up(int(tile), gran)
    t = min(t, _round_up(n_rows, gran))
    return max(t, gran)


# --------------------------------------------------------------------------
# Kernels
# --------------------------------------------------------------------------
def _euc_packed_kernel(x_ref, y_ref, out_ref, *, seg_width, n_valid_rows, tile,
                       mask_remainder, precision):
    """Packed small-D path: rows are (128 // seg_width) examples side by side.

    Per-example feature sums are segmented lane reductions, computed as one
    matmul against a 0/1 segment matrix on the MXU (f32 accumulation).
    """
    i = pl.program_id(0)
    x = x_ref[...]
    y = y_ref[...]
    row_width = x.shape[-1]                      # 128

    # S[j, g] = 1 iff lane j belongs to segment g (columns >= k are all-zero,
    # those segments contribute exactly 0 to the loss).
    lane = jax.lax.broadcasted_iota(jnp.int32, (row_width, 128), 0)
    col = jax.lax.broadcasted_iota(jnp.int32, (row_width, 128), 1)
    s_mat = (lane // seg_width == col).astype(x.dtype)

    sx = jnp.dot(x * x, s_mat, preferred_element_type=jnp.float32,
                 precision=precision)
    sy = jnp.dot(y * y, s_mat, preferred_element_type=jnp.float32,
                 precision=precision)
    sxy = jnp.dot(x * y, s_mat, preferred_element_type=jnp.float32,
                  precision=precision)

    eps2 = jnp.float32(_EPS2)
    inv_x = jax.lax.rsqrt(jnp.maximum(sx, eps2))   # 1 / max(||x||, eps)
    inv_y = jax.lax.rsqrt(jnp.maximum(sy, eps2))
    per = (sx * (inv_x * inv_x)
           + sy * (inv_y * inv_y)
           - 2.0 * sxy * (inv_x * inv_y))
    per = jnp.maximum(per, 0.0)                    # guard cancellation

    out_ref[...] = jnp.broadcast_to(jnp.sum(per), out_ref.shape).astype(jnp.float32)

    if mask_remainder:
        @pl.when(i == pl.num_programs(0) - 1)
        def _():
            ridx = i * tile + jax.lax.broadcasted_iota(jnp.int32, per.shape, 0)
            masked = jnp.where(ridx < n_valid_rows, per, jnp.float32(0.0))
            out_ref[...] = jnp.broadcast_to(jnp.sum(masked),
                                            out_ref.shape).astype(jnp.float32)


def _euc_unpacked_kernel(x_ref, y_ref, out_ref, *, feature_axis, n_valid, tile,
                         mask_remainder):
    """General path: VPU reductions along the feature axis of the block."""
    # TODO(synk): for bf16 + feature_axis==1 the feature sums could also be
    # offloaded to the MXU; the packed path already covers the common small-D case.
    i = pl.program_id(0)
    x = x_ref[...].astype(jnp.float32)
    y = y_ref[...].astype(jnp.float32)

    sx = jnp.sum(x * x, axis=feature_axis, keepdims=True)
    sy = jnp.sum(y * y, axis=feature_axis, keepdims=True)
    sxy = jnp.sum(x * y, axis=feature_axis, keepdims=True)

    eps2 = jnp.float32(_EPS2)
    inv_x = jax.lax.rsqrt(jnp.maximum(sx, eps2))
    inv_y = jax.lax.rsqrt(jnp.maximum(sy, eps2))
    per = (sx * (inv_x * inv_x)
           + sy * (inv_y * inv_y)
           - 2.0 * sxy * (inv_x * inv_y))
    per = jnp.maximum(per, 0.0)

    out_ref[...] = jnp.broadcast_to(jnp.sum(per), out_ref.shape).astype(jnp.float32)

    if mask_remainder:
        batch_axis = 1 - feature_axis
        @pl.when(i == pl.num_programs(0) - 1)
        def _():
            idx = i * tile + jax.lax.broadcasted_iota(jnp.int32, per.shape, batch_axis)
            masked = jnp.where(idx < n_valid, per, jnp.float32(0.0))
            out_ref[...] = jnp.broadcast_to(jnp.sum(masked),
                                            out_ref.shape).astype(jnp.float32)


def _partials_call(kernel, x, y, block_shape, index_map, num_blocks, vmem_limit):
    return pl.pallas_call(
        kernel,
        out_shape=jax.ShapeDtypeStruct((num_blocks, 1, 128), jnp.float32),
        grid_spec=pl.GridSpec(
            grid=(num_blocks,),
            in_specs=[pl.BlockSpec(block_shape, index_map),
                      pl.BlockSpec(block_shape, index_map)],
            out_specs=pl.BlockSpec((1, 1, 128), lambda i: (i, 0, 0)),
        ),
        compiler_params=pltpu.CompilerParams(
            dimension_semantics=("parallel",),
            vmem_limit_bytes=vmem_limit,
        ),
    )(x, y)


# --------------------------------------------------------------------------
# Wrapper
# --------------------------------------------------------------------------
def euc_loss(output1: jax.Array,
             output2: jax.Array,
             *,
             feature_axis: int = 1,
             tile: int | None = None,
             pack: bool = True,
             vmem_budget_bytes: int | None = None,
             vmem_limit_bytes: int | None = None,
             min_grid_blocks: int = 4) -> jax.Array:
    """Pallas implementation of EucLoss.forward. Returns a float32 scalar.

    feature_axis=1: inputs are (N, D), normalization over D (PyTorch dim=1).
    feature_axis=0: inputs are (D, N) (lane-dense layout for callers that can
                    supply transposed data).
    Inputs may be f32 or bf16; reductions accumulate in f32.
    """
    assert output1.shape == output2.shape, "inputs must have the same shape"
    assert output1.ndim == 2, "inputs must be rank-2"     # TODO(synk): >2-D inputs
    assert feature_axis in (0, 1)

    if vmem_budget_bytes is None or vmem_limit_bytes is None:
        auto_budget, auto_limit = _default_vmem_budgets()
        vmem_budget_bytes = vmem_budget_bytes or auto_budget
        vmem_limit_bytes = vmem_limit_bytes or auto_limit

    dtype = output1.dtype
    itemsize = jnp.dtype(dtype).itemsize
    batch_axis = 1 - feature_axis
    n_batch = output1.shape[batch_axis]
    n_feat = output1.shape[feature_axis]

    # ---- packed small-D fast path: (N, D) -> (N // k, k * D = 128) ----------
    k = 0
    if pack and feature_axis == 1 and 0 < n_feat < 128 and 128 % n_feat == 0:
        k = 128 // n_feat
        if n_batch % k != 0:
            k = 0
    if k > 1:
        n_rows = n_batch // k
        x = output1.reshape(n_rows, 128)          # free row-major reshape
        y = output2.reshape(n_rows, 128)
        gran = _sublane_gran(dtype)
        # Per packed row: 2 inputs x 2 pipeline buffers + product temporaries.
        bytes_per_row = 4 * 128 * itemsize + 2 * 128 * 4
        t = _pick_tile(tile, n_rows, gran, vmem_budget_bytes, bytes_per_row,
                       min_grid_blocks)
        num_blocks = _cdiv(n_rows, t)
        precision = (jax.lax.Precision.HIGHEST
                     if jnp.dtype(dtype) == jnp.dtype(jnp.float32) else None)
        kernel = functools.partial(
            _euc_packed_kernel, seg_width=n_feat, n_valid_rows=n_rows, tile=t,
            mask_remainder=(n_rows % t != 0), precision=precision)
        try:
            partials = _partials_call(kernel, x, y, (t, 128), lambda i: (i, 0),
                                      num_blocks, vmem_limit_bytes)
            return jnp.sum(partials[:, 0, 0])
        except Exception:
            # Safety net: fall back to the general (previously validated) path.
            pass

    # ---- general path -------------------------------------------------------
    if batch_axis == 0:                           # (N, D): features on lanes
        gran = _sublane_gran(dtype)
        padded_feat = _round_up(n_feat, 128)      # lane padding of the block
        bytes_per_row = 4 * padded_feat * itemsize + 4 * padded_feat * 4
        t = _pick_tile(tile, n_batch, gran, vmem_budget_bytes, bytes_per_row,
                       min_grid_blocks)
        block_shape = (t, n_feat)
        index_map = lambda i: (i, 0)
    else:                                         # (D, N): batch on lanes
        gran = 128
        padded_feat = _round_up(n_feat, _sublane_gran(dtype))
        bytes_per_col = 4 * padded_feat * itemsize + 4 * padded_feat * 4
        t = _pick_tile(tile, n_batch, gran, vmem_budget_bytes, bytes_per_col,
                       min_grid_blocks)
        block_shape = (n_feat, t)
        index_map = lambda i: (0, i)

    num_blocks = _cdiv(n_batch, t)
    kernel = functools.partial(
        _euc_unpacked_kernel, feature_axis=feature_axis, n_valid=n_batch,
        tile=t, mask_remainder=(n_batch % t != 0))
    partials = _partials_call(kernel, output1, output2, block_shape, index_map,
                              num_blocks, vmem_limit_bytes)
    return jnp.sum(partials[:, 0, 0])


def _euc_loss_ref(o1, o2):
    """Pure-JAX reference matching torch F.normalize(dim=1) + squared-distance sum."""
    eps = 1e-12
    n1 = jnp.maximum(jnp.sqrt(jnp.sum(o1 * o1, axis=1, keepdims=True)), eps)
    n2 = jnp.maximum(jnp.sqrt(jnp.sum(o2 * o2, axis=1, keepdims=True)), eps)
    d = o1 / n1 - o2 / n2
    return jnp.sum(jnp.sum(d * d, axis=1))


if __name__ == "__main__":
    key = jax.random.PRNGKey(0)
    key1, key2 = jax.random.split(key)
    # N=40 is deliberately not a multiple of the tile sizes below so the
    # remainder-masking paths are exercised; D=32 triggers the packed path.
    N, D = 40, 32
    o1 = jax.random.normal(key1, (N, D), dtype=jnp.float32)
    o2 = jax.random.normal(key2, (N, D), dtype=jnp.float32)
    ref = _euc_loss_ref(o1, o2)

    # 1) Packed fast path (4 rows per 128-lane row), auto VMEM-budgeted tile.
    loss = euc_loss(o1, o2)
    jax.block_until_ready(loss)
    assert jnp.allclose(loss, ref, rtol=5e-3, atol=5e-3), (loss, ref)

    # 2) Packed path, tiny explicit tile -> multi-block grid + masked remainder.
    loss_small = euc_loss(o1, o2, tile=8)
    jax.block_until_ready(loss_small)
    assert jnp.allclose(loss_small, ref, rtol=5e-3, atol=5e-3), (loss_small, ref)

    # 3) General (N, D) path with packing disabled.
    loss_u = euc_loss(o1, o2, pack=False, tile=16)
    jax.block_until_ready(loss_u)
    assert jnp.allclose(loss_u, ref, rtol=1e-5, atol=1e-5), (loss_u, ref)

    # 4) Lane-dense (D, N) layout for callers that can supply transposed data.
    loss_t = euc_loss(o1.T, o2.T, feature_axis=0)
    jax.block_until_ready(loss_t)
    assert jnp.allclose(loss_t, ref, rtol=1e-5, atol=1e-5), (loss_t, ref)

    # 5) bf16 inputs exercise the native-bf16 MXU reduction (no f32 upcast).
    o1b = o1.astype(jnp.bfloat16)
    o2b = o2.astype(jnp.bfloat16)
    ref_b = _euc_loss_ref(o1b.astype(jnp.float32), o2b.astype(jnp.float32))
    loss_b = euc_loss(o1b, o2b)
    jax.block_until_ready(loss_b)
    assert jnp.allclose(loss_b, ref_b, rtol=3e-2, atol=3e-2), (loss_b, ref_b)

    print("KERNEL_OK")
</pallas_src>

<mosaic_0001>
module attributes {stable_mosaic.version = 11 : i64} {
  func.func @_euc_unpacked_kernel(%arg0: i32, %arg1: memref<16x32xf32, #tpu.memory_space<vmem>>, %arg2: memref<16x32xf32, #tpu.memory_space<vmem>>, %arg3: memref<1x1x128xf32, #tpu.memory_space<vmem>>) attributes {dimension_semantics = [#tpu.dimension_semantics<parallel>], iteration_bounds = array<i64: 3>, scalar_prefetch = 0 : i64, scratch_operands = 0 : i64, tpu.core_type = #tpu.core_type<tc>, window_params = [{transform_indices = @transform_0, window_bounds = array<i64: 16, 32>}, {transform_indices = @transform_1, window_bounds = array<i64: 16, 32>}, {transform_indices = @transform_2, window_bounds = array<i64: 1, 1, 128>}]} {
    %c0 = arith.constant 0 : index
    %c0_0 = arith.constant 0 : index
    %0 = vector.load %arg1[%c0, %c0_0] : memref<16x32xf32, #tpu.memory_space<vmem>>, vector<16x32xf32>
    %c0_1 = arith.constant 0 : index
    %c0_2 = arith.constant 0 : index
    %1 = vector.load %arg2[%c0_1, %c0_2] : memref<16x32xf32, #tpu.memory_space<vmem>>, vector<16x32xf32>
    %2 = arith.mulf %0, %0 : vector<16x32xf32>
    %cst = arith.constant dense<0.000000e+00> : vector<16xf32>
    %3 = vector.multi_reduction <add>, %2, %cst [1] : vector<16x32xf32> to vector<16xf32>
    %4 = vector.shape_cast %3 : vector<16xf32> to vector<16x1xf32>
    %5 = arith.mulf %1, %1 : vector<16x32xf32>
    %cst_3 = arith.constant dense<0.000000e+00> : vector<16xf32>
    %6 = vector.multi_reduction <add>, %5, %cst_3 [1] : vector<16x32xf32> to vector<16xf32>
    %7 = vector.shape_cast %6 : vector<16xf32> to vector<16x1xf32>
    %8 = arith.mulf %0, %1 : vector<16x32xf32>
    %cst_4 = arith.constant dense<0.000000e+00> : vector<16xf32>
    %9 = vector.multi_reduction <add>, %8, %cst_4 [1] : vector<16x32xf32> to vector<16xf32>
    %10 = vector.shape_cast %9 : vector<16xf32> to vector<16x1xf32>
    %cst_5 = arith.constant 1.000000e-24 : f32
    %11 = vector.broadcast %cst_5 : f32 to vector<16x1xf32>
    %12 = arith.maximumf %4, %11 : vector<16x1xf32>
    %13 = math.rsqrt %12 : vector<16x1xf32>
    %cst_6 = arith.constant 1.000000e-24 : f32
    %14 = vector.broadcast %cst_6 : f32 to vector<16x1xf32>
    %15 = arith.maximumf %7, %14 : vector<16x1xf32>
    %16 = math.rsqrt %15 : vector<16x1xf32>
    %17 = arith.mulf %13, %13 : vector<16x1xf32>
    %18 = arith.mulf %4, %17 : vector<16x1xf32>
    %19 = arith.mulf %16, %16 : vector<16x1xf32>
    %20 = arith.mulf %7, %19 : vector<16x1xf32>
    %21 = arith.addf %18, %20 : vector<16x1xf32>
    %cst_7 = arith.constant 2.000000e+00 : f32
    %22 = vector.broadcast %cst_7 : f32 to vector<16x1xf32>
    %23 = arith.mulf %22, %10 : vector<16x1xf32>
    %24 = arith.mulf %13, %16 : vector<16x1xf32>
    %25 = arith.mulf %23, %24 : vector<16x1xf32>
    %26 = arith.subf %21, %25 : vector<16x1xf32>
    %cst_8 = arith.constant 0.000000e+00 : f32
    %27 = vector.broadcast %cst_8 : f32 to vector<16x1xf32>
    %28 = arith.maximumf %26, %27 : vector<16x1xf32>
    %29 = vector.shape_cast %28 : vector<16x1xf32> to vector<1x16x1xf32>
    %cst_9 = arith.constant dense<0.000000e+00> : vector<1xf32>
    %30 = vector.multi_reduction <add>, %29, %cst_9 [1, 2] : vector<1x16x1xf32> to vector<1xf32>
    %31 = vector.shape_cast %30 : vector<1xf32> to vector<1x1x1xf32>
    %32 = vector.extract %31[0, 0, 0] : f32 from vector<1x1x1xf32>
    %33 = vector.broadcast %32 : f32 to vector<1x1x128xf32>
    %c0_10 = arith.constant 0 : index
    %c0_11 = arith.constant 0 : index
    %c0_12 = arith.constant 0 : index
    %34 = vector.load %arg3[%c0_10, %c0_11, %c0_12] : memref<1x1x128xf32, #tpu.memory_space<vmem>>, vector<1x1x128xf32>
    tpu.vector_store %arg3[%c0_10, %c0_11, %c0_12], %33 {strides = array<i32>} : memref<1x1x128xf32, #tpu.memory_space<vmem>>, vector<1x1x128xf32>,
    %c2_i32 = arith.constant 2 : i32
    %35 = arith.cmpi eq, %arg0, %c2_i32 : i32
    %36 = arith.extui %35 : i1 to i32
    %c0_i32 = arith.constant 0 : i32
    %37 = arith.cmpi ne, %36, %c0_i32 : i32
    scf.if %37 {
      %c16_i32 = arith.constant 16 : i32
      %38 = arith.muli %arg0, %c16_i32 : i32
      %39 = tpu.iota {dimensions = array<i32: 0>} : vector<16x1xi32>
      %40 = vector.broadcast %38 : i32 to vector<16x1xi32>
      %41 = arith.addi %40, %39 : vector<16x1xi32>
      %c40_i32 = arith.constant 40 : i32
      %42 = vector.broadcast %c40_i32 : i32 to vector<16x1xi32>
      %43 = arith.cmpi slt, %41, %42 : vector<16x1xi32>
      %cst_13 = arith.constant 0.000000e+00 : f32
      %44 = vector.broadcast %cst_13 : f32 to vector<16x1xf32>
      %45 = arith.select %43, %28, %44 : vector<16x1xi1>, vector<16x1xf32>
      %46 = vector.shape_cast %45 : vector<16x1xf32> to vector<1x16x1xf32>
      %cst_14 = arith.constant dense<0.000000e+00> : vector<1xf32>
      %47 = vector.multi_reduction <add>, %46, %cst_14 [1, 2] : vector<1x16x1xf32> to vector<1xf32>
      %48 = vector.shape_cast %47 : vector<1xf32> to vector<1x1x1xf32>
      %49 = vector.extract %48[0, 0, 0] : f32 from vector<1x1x1xf32>
      %50 = vector.broadcast %49 : f32 to vector<1x1x128xf32>
      %c0_15 = arith.constant 0 : index
      %c0_16 = arith.constant 0 : index
      %c0_17 = arith.constant 0 : index
      %51 = vector.load %arg3[%c0_15, %c0_16, %c0_17] : memref<1x1x128xf32, #tpu.memory_space<vmem>>, vector<1x1x128xf32>
      tpu.vector_store %arg3[%c0_15, %c0_16, %c0_17], %50 {strides = array<i32>} : memref<1x1x128xf32, #tpu.memory_space<vmem>>, vector<1x1x128xf32>,
    } else {
    }
    return
  }
  func.func @transform_0(%arg0: i32) -> (i32, i32) {
    %c0_i32 = arith.constant 0 : i32
    %c0_i32_0 = arith.constant 0 : i32
    return %arg0, %c0_i32 : i32, i32
  }
  func.func @transform_1(%arg0: i32) -> (i32, i32) {
    %c0_i32 = arith.constant 0 : i32
    %c0_i32_0 = arith.constant 0 : i32
    return %arg0, %c0_i32 : i32, i32
  }
  func.func @transform_2(%arg0: i32) -> (i32, i32, i32) {
    %c0_i32 = arith.constant 0 : i32
    %c0_i32_0 = arith.constant 0 : i32
    %c0_i32_1 = arith.constant 0 : i32
    return %arg0, %c0_i32, %c0_i32_0 : i32, i32, i32
  }
}

</mosaic_0001>

<llo_original>
// kernel: tpu_custom_call.1
$region0: #{tpu_custom_call.1}
  #allocation0 [shape = 'u32[]', space=smem, size = 0x4, offset = 0x4, fixed_abs, tag = 'smem constant byte address 0x4 - core index']
  #allocation1 [shape = 'u32[144,128]{1,0:T(1,128)}', space=vmem, size = 0x12000, scoped, tag = 'internal scratch']
  %s0 = inlined_call_operand.vmem [shape: f32[40,32], index: 0, kind: input, shape index: {}]
  %s1 = inlined_call_operand.vmem [shape: f32[40,32], index: 1, kind: input, shape index: {}]
  %s2 = inlined_call_operand.hbm [shape: f32[3,1,128], index: 2, kind: output, shape index: {}]
  %s3 = sld [smem:[#allocation0]]
  $region45: #{tpu_custom_call.1} parent=0
    _
  %s5 = ssub.s32 1, %s3
  %s6 = scalar_select 0, %s5, %s3
  $region1: #{tpu_custom_call.1} parent=0
    #allocation2 [shape = 'u8[1024]{0}', space=vmem, size = 0x400, scoped, tag = 'output window, operand 0']
    #allocation3 [shape = 's32[2]{0}', space=sflag, size = 0x8, scoped, tag = 'scoped memory for tpu_custom_call.1']
    %7 = vsyncpa [#allocation3], 0
    %s8 = scalar_lea.sflag [#allocation3], 1
    %9 = vsyncpa %s8, 0
    loop: start=0, step=1, limit=5
    $region2: #{tpu_custom_call.1} parent=1 // loop_pre_header
      _
    $region3: #{tpu_custom_call.1} parent=1 // loop_header
      %s11 = sphi 0, %s15
      %p12 = scmp.ge.s32.totalorder %s11, 5
      %s21 = sphi 0, %s23
      %s24 = sphi 0, %s21
      %s25 = sphi 0, %s24
      %s41 = sphi 0, %s25
      %s47 = sphi 0, %s49
      %s50 = sphi 0, %s47
      %s51 = sphi 0, %s50
      %s67 = sphi 0, %s51
      %s73 = sphi 0, %s75
      %s76 = sphi 0, %s73
      %s77 = sphi 0, %s76
      %s93 = sphi 0, %s77
    $region4: #{tpu_custom_call.1} parent=1 // loop_header_branch
      %14 = sbr.rel (%p12) target = $region8
    $region5: #{tpu_custom_call.1} parent=1 // loop_body
      %s16 = ssub.s32 %s11, 1
      %s17 = ssub.s32 %s11, 2
      %s18 = sadd.s32 %s11, 1
      %s19 = ssub.s32 %s11, %s18
      %p20 = scmp.eq.s32.totalorder %s19, 0
      %s22 = sadd.s32 %s21, 1
      %s23 = scalar_select %p20, %s21, %s22
      %p26 = pneg %p20
      %p27 = scmp.eq.s32.totalorder %s11, 2
      %p28 = por %p26, %p27
      %p29 = scmp.ne.s32.totalorder %s21, %s24
      %p30 = scmp.eq.s32.totalorder %s11, 0
      %p31 = por %p29, %p30
      %p32 = scmp.ne.s32.totalorder %s21, %s24
      %p33 = scmp.eq.s32.totalorder %s16, 2
      %p34 = por %p32, %p33
      %p35 = scmp.ne.s32.totalorder %s24, %s25
      %p36 = scmp.eq.s32.totalorder %s16, 0
      %p37 = por %p35, %p36
      %p38 = scmp.ne.s32.totalorder %s24, %s25
      %p39 = scmp.eq.s32.totalorder %s17, 2
      %p40 = por %p38, %p39
      %p42 = scmp.ne.s32.totalorder %s25, %s41
      %p43 = scmp.eq.s32.totalorder %s17, 0
      %p44 = por %p42, %p43
      %s45 = ssub.s32 %s11, %s18
      %p46 = scmp.eq.s32.totalorder %s45, 0
      %s48 = sadd.s32 %s47, 1
      %s49 = scalar_select %p46, %s47, %s48
      %p52 = pneg %p46
      %p53 = scmp.eq.s32.totalorder %s11, 2
      %p54 = por %p52, %p53
      %p55 = scmp.ne.s32.totalorder %s47, %s50
      %p56 = scmp.eq.s32.totalorder %s11, 0
      %p57 = por %p55, %p56
      %p58 = scmp.ne.s32.totalorder %s47, %s50
      %p59 = scmp.eq.s32.totalorder %s16, 2
      %p60 = por %p58, %p59
      %p61 = scmp.ne.s32.totalorder %s50, %s51
      %p62 = scmp.eq.s32.totalorder %s16, 0
      %p63 = por %p61, %p62
      %p64 = scmp.ne.s32.totalorder %s50, %s51
      %p65 = scmp.eq.s32.totalorder %s17, 2
      %p66 = por %p64, %p65
      %p68 = scmp.ne.s32.totalorder %s51, %s67
      %p69 = scmp.eq.s32.totalorder %s17, 0
      %p70 = por %p68, %p69
      %s71 = ssub.s32 %s11, %s18
      %p72 = scmp.eq.s32.totalorder %s71, 0
      %s74 = sadd.s32 %s73, 1
      %s75 = scalar_select %p72, %s73, %s74
      %p78 = pneg %p72
      %p79 = scmp.eq.s32.totalorder %s11, 2
      %p80 = por %p78, %p79
      %p81 = scmp.ne.s32.totalorder %s73, %s76
      %p82 = scmp.eq.s32.totalorder %s11, 0
      %p83 = por %p81, %p82
      %p84 = scmp.ne.s32.totalorder %s73, %s76
      %p85 = scmp.eq.s32.totalorder %s16, 2
      %p86 = por %p84, %p85
      %p87 = scmp.ne.s32.totalorder %s76, %s77
      %p88 = scmp.eq.s32.totalorder %s16, 0
      %p89 = por %p87, %p88
      %p90 = scmp.ne.s32.totalorder %s76, %s77
      %p91 = scmp.eq.s32.totalorder %s17, 2
      %p92 = por %p90, %p91
      %p94 = scmp.ne.s32.totalorder %s77, %s93
      %p95 = scmp.eq.s32.totalorder %s17, 0
      %p96 = por %p94, %p95
      %p97 = scmp.le.s32.totalorder 1, %s11
      %p98 = scmp.lt.s32.totalorder %s11, 4
      %p99 = pnand %p97, %p98
      %p100 = pneg %p99
      // Predicated region
      $region9: #{tpu_custom_call.1} parent=5 // pred_check
        _
      $region10: #{tpu_custom_call.1} parent=5 // pred_check_branch
        %102 = sbr.rel (%p99) target = $region12
      $region11: #{tpu_custom_call.1} parent=5 // pred_region
        %s103 = ssub.s32 %s11, 1
      $region12: #{tpu_custom_call.1} parent=5 // pred_fallthru
        _
      %p104 = scmp.lt.s32.totalorder %s11, 3
      // Predicated region
      $region13: #{tpu_custom_call.1} parent=5 // pred_check
        %p105 = pneg %p104
      $region14: #{tpu_custom_call.1} parent=5 // pred_check_branch
        %107 = sbr.rel (%p105) target = $region16
      $region15: #{tpu_custom_call.1} parent=5 // pred_region
        // Predicated region
        $region17: #{tpu_custom_call.1} parent=15 // pred_check
          %p108 = pneg %p31
        $region18: #{tpu_custom_call.1} parent=15 // pred_check_branch
          %110 = sbr.rel (%p108) target = $region20
        $region19: #{tpu_custom_call.1} parent=15 // pred_region
          %s111 = smul.u32 2, %s11
          %s112 = ssub.s32 5, %s111
          %p113 = scmp.lt.s32.totalorder %s112, 2
          %s114 = scalar_select %p113, %s112, 2
          %s115 = smul.u32 128, %s114
          %p116 = scmp.lt.s32.totalorder %s111, 4
          %s117 = scalar_select %p116, %s111, 4
          %s118 = smul.addr %s117, 8
          %s119 = scalar_lea.vmem %s0, %s118
          %s120 = smul.u32 2, %s11
          %s121 = ssub.s32 5, %s120
          %p122 = scmp.lt.s32.totalorder %s121, 2
          %s123 = scalar_select %p122, %s121, 2
          %s124 = smul.u32 128, %s123
        $region20: #{tpu_custom_call.1} parent=15 // pred_fallthru
          _
        // Predicated region
        $region21: #{tpu_custom_call.1} parent=15 // pred_check
          %p125 = pneg %p57
        $region22: #{tpu_custom_call.1} parent=15 // pred_check_branch
          %127 = sbr.rel (%p125) target = $region24
        $region23: #{tpu_custom_call.1} parent=15 // pred_region
          %s128 = smul.u32 2, %s11
          %s129 = ssub.s32 5, %s128
          %p130 = scmp.lt.s32.totalorder %s129, 2
          %s131 = scalar_select %p130, %s129, 2
          %s132 = smul.u32 128, %s131
          %p133 = scmp.lt.s32.totalorder %s128, 4
          %s134 = scalar_select %p133, %s128, 4
          %s135 = smul.addr %s134, 8
          %s136 = scalar_lea.vmem %s1, %s135
          %s137 = smul.u32 2, %s11
          %s138 = ssub.s32 5, %s137
          %p139 = scmp.lt.s32.totalorder %s138, 2
          %s140 = scalar_select %p139, %s138, 2
          %s141 = smul.u32 128, %s140
        $region24: #{tpu_custom_call.1} parent=15 // pred_fallthru
          _
      $region16: #{tpu_custom_call.1} parent=5 // pred_fallthru
        _
      %p142 = scmp.le.s32.totalorder 1, %s11
      %p143 = scmp.lt.s32.totalorder %s11, 4
      %p144 = pnand %p142, %p143
      %p145 = pneg %p144
      // Predicated region
      $region25: #{tpu_custom_call.1} parent=5 // pred_check
        _
      $region26: #{tpu_custom_call.1} parent=5 // pred_check_branch
        %147 = sbr.rel (%p144) target = $region28
      $region27: #{tpu_custom_call.1} parent=5 // pred_region
        %s148 = ssub.s32 %s11, 1
        %s149 = smul.u32 2, %s16
        %s150 = ssub.s32 5, %s149
        %p151 = scmp.lt.s32.totalorder %s150, 2
        %s152 = scalar_select %p151, %s150, 2
        %s153 = smul.u32 128, %s152
        %p154 = scmp.lt.s32.totalorder %s149, 4
        %s155 = scalar_select %p154, %s149, 4
        %s156 = smul.addr %s155, 8
        %s157 = scalar_lea.vmem %s0, %s156
        %p158 = pneg %p37
        %p159 = pneg %p34
        %s160 = smul.u32 2, %s16
        %s161 = ssub.s32 5, %s160
        %p162 = scmp.lt.s32.totalorder %s161, 2
        %s163 = scalar_select %p162, %s161, 2
        %s164 = smul.u32 128, %s163
        %p165 = scmp.lt.s32.totalorder %s160, 4
        %s166 = scalar_select %p165, %s160, 4
        %s167 = smul.addr %s166, 8
        %s168 = scalar_lea.vmem %s1, %s167
        %p169 = pneg %p63
        %p170 = pneg %p60
        %p171 = pneg %p89
        %p172 = pneg %p86
        %s173 = sand.u32 %s76, 1
        %s174 = scalar_lea.sflag [#allocation3], %s173
        %s175 = sand.u32 %s76, 1
        %s176 = scalar_lea.vmem [#allocation2], %s175
        %s177 = smul.u32 2, %s16
        %s178 = ssub.s32 5, %s177
        %p179 = scmp.lt.s32.totalorder %s178, 2
        %s180 = scalar_select %p179, %s178, 2
        %s181 = smul.u32 128, %s180
        %p182 = scmp.lt.s32.totalorder %s177, 4
        %s183 = scalar_select %p182, %s177, 4
        %s184 = smul.addr %s183, 8
        %s185 = scalar_lea.vmem %s0, %s184
        %s186 = smul.u32 2, %s16
        %s187 = ssub.s32 5, %s186
        %p188 = scmp.lt.s32.totalorder %s187, 2
        %s189 = scalar_select %p188, %s187, 2
        %s190 = smul.u32 128, %s189
        %s191 = smul.u32 2, %s16
        %s192 = ssub.s32 5, %s191
        %p193 = scmp.lt.s32.totalorder %s192, 2
        %s194 = scalar_select %p193, %s192, 2
        %s195 = smul.u32 128, %s194
        %p196 = scmp.lt.s32.totalorder %s191, 4
        %s197 = scalar_select %p196, %s191, 4
        %s198 = smul.addr %s197, 8
        %s199 = scalar_lea.vmem %s1, %s198
        %s200 = smul.u32 2, %s16
        %s201 = ssub.s32 5, %s200
        %p202 = scmp.lt.s32.totalorder %s201, 2
        %s203 = scalar_select %p202, %s201, 2
        %s204 = smul.u32 128, %s203
        %v205 = vld [vmem:[%s185] sm:$0xff]
        %v206 = vld [vmem:[%s185 + $0x8] sm:$0xff]
        %v207 = vld [vmem:[%s199] sm:$0xff]
        %v208 = vld [vmem:[%s199 + $0x8] sm:$0xff]
        %v209 = vmul.f32 %v205, %v205
        %v210 = vmul.f32 %v206, %v206
        %vm211 = vcmask 261120
        %v212 = vsel %vm211, %v209, 0.0
        %213 = vadd.xlane.f32.xlu0 %v212
        %v214 = vpop.xlane.xlu0 %213
        %v215 = vsel %vm211, %v210, 0.0
        %216 = vadd.xlane.f32.xlu0 %v215
        %v217 = vpop.xlane.xlu0 %216
        %v218 = vmul.f32 %v207, %v207
        %v219 = vmul.f32 %v208, %v208
        %v220 = vsel %vm211, %v218, 0.0
        %221 = vadd.xlane.f32.xlu0 %v220
        %v222 = vpop.xlane.xlu0 %221
        %v223 = vsel %vm211, %v219, 0.0
        %224 = vadd.xlane.f32.xlu0 %v223
        %v225 = vpop.xlane.xlu0 %224
        %v226 = vmul.f32 %v205, %v207
        %v227 = vmul.f32 %v206, %v208
        %v228 = vsel %vm211, %v226, 0.0
        %229 = vadd.xlane.f32.xlu0 %v228
        %v230 = vpop.xlane.xlu0 %229
        %v231 = vsel %vm211, %v227, 0.0
        %232 = vadd.xlane.f32.xlu0 %v231
        %v233 = vpop.xlane.xlu0 %232
        %v234 = vmax.f32 %v214, 1e-24
        %v235 = vmax.f32 %v217, 1e-24
        %v236 = vrsqrt.pop %v234
        %v237 = vrsqrt.pop %v235
        %v238 = vmax.f32 %v222, 1e-24
        %v239 = vmax.f32 %v225, 1e-24
        %v240 = vrsqrt.pop %v238
        %v241 = vrsqrt.pop %v239
        %v242 = vmul.f32 %v236, %v236
        %v243 = vmul.f32 %v237, %v237
        %v244 = vmul.f32 %v214, %v242
        %v245 = vmul.f32 %v217, %v243
        %v246 = vmul.f32 %v240, %v240
        %v247 = vmul.f32 %v241, %v241
        %v248 = vmul.f32 %v222, %v246
        %v249 = vmul.f32 %v225, %v247
        %v250 = vadd.f32 %v244, %v248
        %v251 = vadd.f32 %v245, %v249
        %v252 = vmul.f32 %v230, 2.0
        %v253 = vmul.f32 %v233, 2.0
        %v254 = vmul.f32 %v236, %v240
        %v255 = vmul.f32 %v237, %v241
        %v256 = vmul.f32 %v252, %v254
        %v257 = vmul.f32 %v253, %v255
        %v258 = vsub.f32 %v250, %v256
        %v259 = vsub.f32 %v251, %v257
        %v260 = vmax.f32 %v258, 0.0
        %v261 = vmax.f32 %v259, 0.0
        %vm262 = vcmask 7168
        %v263 = vsel %vm262, %v260, 0.0
        %v264 = vsel %vm262, %v261, 0.0
        %v265 = vadd.f32 %v263, %v264
        %266 = vadd.xlane.f32.xlu0 %v265
        %v267 = vpop.xlane.xlu0 %266
        %v268 = vrot.slane %v267, 4
        %v269 = vadd.f32 %v267, %v268
        %v270 = vrot.slane %v269, 2
        %v271 = vadd.f32 %v269, %v270
        %v272 = vrot.slane %v271, 1
        %v273 = vadd.f32 %v271, %v272
        %s274 = vtos %v273
        %v275 = vstv %s274
        %276 = vst [vmem:[%s176] sm:$0x1] %v275
        %p277 = scmp.eq.s32.totalorder %s16, 2
        // Predicated region
        $region29: #{tpu_custom_call.1} parent=27 // pred_check
          %p278 = pneg %p277
        $region30: #{tpu_custom_call.1} parent=27 // pred_check_branch
          %280 = sbr.rel (%p278) target = $region32
        $region31: #{tpu_custom_call.1} parent=27 // pred_region
          %s281 = smul.u32 %s16, 16
          %v282 = vlaneseq
          %v283 = vshrl.u32 %v282, 7
          %v284 = vadd.s32 %v283, 8
          %v285 = vstv %s281
          %v286 = vadd.s32 %v285, %v283
          %v287 = vadd.s32 %v285, %v284
          %vm288 = vcmp.lt.s32.totalorder %v286, 40
          %vm289 = vcmp.lt.s32.totalorder %v287, 40
          %v290 = vsel %vm288, %v260, 0.0
          %v291 = vsel %vm289, %v261, 0.0
          %v292 = vsel %vm262, %v290, 0.0
          %v293 = vsel %vm262, %v291, 0.0
          %v294 = vadd.f32 %v292, %v293
          %295 = vadd.xlane.f32.xlu0 %v294
          %v296 = vpop.xlane.xlu0 %295
          %v297 = vrot.slane %v296, 4
          %v298 = vadd.f32 %v296, %v297
          %v299 = vrot.slane %v298, 2
          %v300 = vadd.f32 %v298, %v299
          %v301 = vrot.slane %v300, 1
          %v302 = vadd.f32 %v300, %v301
          %s303 = vtos %v302
          %v304 = vstv %s303
          %305 = vst [vmem:[%s176] sm:$0x1] %v304
        $region32: #{tpu_custom_call.1} parent=27 // pred_fallthru
          _
        %s306 = sand.u32 %s76, 1
        %s307 = scalar_lea.sflag [#allocation3], %s306
        %s308 = sand.u32 %s76, 1
        %s309 = scalar_lea.vmem [#allocation2], %s308
        // Predicated region
        $region33: #{tpu_custom_call.1} parent=27 // pred_check
          %p310 = pneg %p86
        $region34: #{tpu_custom_call.1} parent=27 // pred_check_branch
          %312 = sbr.rel (%p310) target = $region36
        $region35: #{tpu_custom_call.1} parent=27 // pred_region
          %s314 = ssub.s32 16, 16
          %315 = vsyncadd %s307, %s314
          %s316 = smul.addr %s16, 16
          %s317 = scalar_lea.hbm %s2, %s316
          %s319 = sshll.u32 %s309, 4
          %s320 = int_to_ptr.vmem [resolvable:$true] %s319
          %322 = dma.vmem_to_hbm [thread:$0]  %s320, 16, %s317, %s307
        $region36: #{tpu_custom_call.1} parent=27 // pred_fallthru
          _
      $region28: #{tpu_custom_call.1} parent=5 // pred_fallthru
        _
      %p323 = scmp.le.s32.totalorder 2, %s11
      // Predicated region
      $region37: #{tpu_custom_call.1} parent=5 // pred_check
        %p324 = pneg %p323
      $region38: #{tpu_custom_call.1} parent=5 // pred_check_branch
        %326 = sbr.rel (%p324) target = $region40
      $region39: #{tpu_custom_call.1} parent=5 // pred_region
        %s327 = ssub.s32 %s11, 2
        // Predicated region
        $region41: #{tpu_custom_call.1} parent=39 // pred_check
          %p328 = pneg %p92
        $region42: #{tpu_custom_call.1} parent=39 // pred_check_branch
          %330 = sbr.rel (%p328) target = $region44
        $region43: #{tpu_custom_call.1} parent=39 // pred_region
          %s331 = sand.u32 %s77, 1
          %s332 = scalar_lea.sflag [#allocation3], %s331
          %s333 = sand.u32 %s77, 1
          %s334 = scalar_lea.vmem [#allocation2], %s333
          %335 = dma.done %s332, 16
        $region44: #{tpu_custom_call.1} parent=39 // pred_fallthru
          _
      $region40: #{tpu_custom_call.1} parent=5 // pred_fallthru
        _
    $region6: #{tpu_custom_call.1} parent=1 // loop_footer
      %s15 = sadd.s32 1, %s11
    $region7: #{tpu_custom_call.1} parent=1 // loop_footer_branch
      %10 = sbr.rel target = $region3
    $region8: #{tpu_custom_call.1} parent=1 // loop_exit
      _
    %336 = vsyncpa [#allocation3], 1
    %s337 = scalar_lea.sflag [#allocation3], 1
    %338 = vsyncpa %s337, 1

</llo_original>
